<compile_context>
chip_gen: v7x
topology: tpu7x:2x2x1
jax: 0.10.0
libtpu: 0.0.40
codegen_flags: <defaults>
</compile_context>

<pallas_src>
import functools

import jax
import jax.numpy as jnp
import numpy as np
from jax.experimental import pallas as pl
from jax.experimental.pallas import tpu as pltpu

ALPHA = 3.0
BETA = 3
PERMUTE_LEN = 4
EPS = 1e-12
# Explicit scoped-VMEM limit: above v5e's 16 MiB default, well under the
# 128 MiB (v5e/v6e) and per-core 64 MiB (v7x) physical capacities.
VMEM_LIMIT_BYTES = 48 << 20


def _hard_darkrank_kernel(s_rows_ref, t_rows_ref, s_t_ref, t_t_ref,
                          sq_s_row_ref, sq_t_row_ref,
                          sq_s_col_ref, sq_t_col_ref, out_ref,
                          *, alpha, beta, permute_len, eps, tm):
    i = pl.program_id(0)
    n = s_t_ref.shape[1]
    row0 = i * tm

    # Gram strips: (TM, D) x (D, N) in the canonical MXU layout.
    gram_t = jnp.dot(t_rows_ref[...], t_t_ref[...],
                     preferred_element_type=jnp.float32)            # (TM, N)
    gram_s = jnp.dot(s_rows_ref[...], s_t_ref[...],
                     preferred_element_type=jnp.float32)            # (TM, N)

    # Squared pairwise distances; norms were hoisted to the wrapper and arrive
    # already in the layouts they are consumed in.
    d2_t = jnp.maximum(sq_t_col_ref[...] + sq_t_row_ref[...] - 2.0 * gram_t, eps)
    d2_s = jnp.maximum(sq_s_col_ref[...] + sq_s_row_ref[...] - 2.0 * gram_s, eps)

    col = jax.lax.broadcasted_iota(jnp.int32, (tm, n), 1)
    local_row = jax.lax.broadcasted_iota(jnp.int32, (tm, n), 0)
    pos_inf = jnp.float32(jnp.inf)

    # Teacher neighbour selection == repeated argmin over squared distance
    # (monotone transform), with the self column pre-masked to +inf.
    masked = jnp.where(col - row0 == local_row, pos_inf, d2_t)

    gathered = []  # permute_len columns of (TM, 1) gathered squared student distances
    for _ in range(permute_len):
        row_min = jnp.min(masked, axis=1, keepdims=True)
        # smallest column index among (unlikely) ties
        idx = jnp.min(jnp.where(masked == row_min, col, n), axis=1, keepdims=True)
        onehot = col == idx
        gathered.append(jnp.sum(jnp.where(onehot, d2_s, 0.0),
                                axis=1, keepdims=True))
        masked = jnp.where(onehot, pos_inf, masked)   # in-place style mask update

    # -alpha * d**beta applied only on the gathered (TM, 1) values.
    def score(d2):
        half, odd = divmod(beta, 2)
        pw = d2 if half >= 1 else jnp.ones_like(d2)
        for _ in range(half - 1):
            pw = pw * d2
        if odd:
            pw = pw * jnp.sqrt(d2)
        return -alpha * pw

    ordered = [score(g) for g in gathered]

    # log_prob[r] = sum_i (ordered[r, i] - logsumexp_{j >= i} ordered[r, j]);
    # the last term is identically zero, so accumulate the suffix LSE backwards.
    lse = ordered[-1]
    log_prob = jnp.zeros_like(lse)
    for a in ordered[-2::-1]:
        m = jnp.maximum(a, lse)
        lse = m + jnp.log(jnp.exp(a - m) + jnp.exp(lse - m))
        log_prob = log_prob + (a - lse)

    # Partial sum of -log_prob for this row tile; mean is taken in the wrapper.
    out_ref[0, 0] = jnp.sum(-log_prob)


def _choose_tile(n, d):
    """Largest anchor-row tile whose (TM, N) strips fit the explicit VMEM limit,
    preferring >= 2 tiles so both v7x TensorCores get work."""
    # Footprint of the grid-invariant residents (double-buffered (D, N)
    # transposed embeddings + norm vectors) plus headroom for compiler temps.
    resident = 2 * 2 * d * n * 4 + 6 * n * 4
    budget = max(VMEM_LIMIT_BYTES - resident - (8 << 20), 2 << 20)
    live_strips = 8          # (TM, N) f32/int32 strips live at peak in the body
    cap = budget // (live_strips * 4 * max(n, 1))
    single = None
    for cand in (512, 256, 128, 64, 32, 16, 8):
        if cand <= cap and n % cand == 0:
            if n // cand >= 2:
                return cand          # keeps both v7x TensorCores busy
            if single is None:
                single = cand
    if single is not None:
        return single
    # TODO(synk): irregular N (no divisor in {8..512}) falls back to one full
    # (N, N) tile; very large ragged N should be padded to a multiple of 8.
    return n


def hard_darkrank_loss(student, teacher, alpha=ALPHA, beta=BETA,
                       permute_len=PERMUTE_LEN):
    student = jnp.asarray(student, jnp.float32)
    teacher = jnp.asarray(teacher, jnp.float32)
    n, d = student.shape
    assert teacher.shape == (n, d)
    assert n > permute_len, "HardDarkRank needs more samples than permute_len"

    tm = _choose_tile(n, d)
    num_tiles = n // tm

    # Grid-invariant precompute hoisted out of the kernel (O(N*D), done once).
    student_t = student.T                      # (D, N): native MXU RHS layout
    teacher_t = teacher.T
    sq_s = jnp.sum(student * student, axis=1)  # (N,)
    sq_t = jnp.sum(teacher * teacher, axis=1)

    kernel = functools.partial(_hard_darkrank_kernel, alpha=float(alpha),
                               beta=int(beta), permute_len=int(permute_len),
                               eps=EPS, tm=tm)

    partials = pl.pallas_call(
        kernel,
        out_shape=jax.ShapeDtypeStruct((num_tiles, 1), jnp.float32),
        grid=(num_tiles,),
        in_specs=[
            pl.BlockSpec((tm, d), lambda i: (i, 0)),   # student anchor rows
            pl.BlockSpec((tm, d), lambda i: (i, 0)),   # teacher anchor rows
            pl.BlockSpec((d, n), lambda i: (0, 0)),    # student.T (resident)
            pl.BlockSpec((d, n), lambda i: (0, 0)),    # teacher.T (resident)
            pl.BlockSpec((1, n), lambda i: (0, 0)),    # student column sq-norms
            pl.BlockSpec((1, n), lambda i: (0, 0)),    # teacher column sq-norms
            pl.BlockSpec((tm, 1), lambda i: (i, 0)),   # student tile sq-norms
            pl.BlockSpec((tm, 1), lambda i: (i, 0)),   # teacher tile sq-norms
        ],
        out_specs=pl.BlockSpec((1, 1), lambda i: (i, 0),
                               memory_space=pltpu.MemorySpace.SMEM),
        compiler_params=pltpu.CompilerParams(
            dimension_semantics=("parallel",),
            vmem_limit_bytes=VMEM_LIMIT_BYTES),
    )(student, teacher, student_t, teacher_t,
      sq_s.reshape(1, n), sq_t.reshape(1, n),
      sq_s.reshape(n, 1), sq_t.reshape(n, 1))
    return jnp.sum(partials) / n


def _reference_loss(student, teacher, alpha=ALPHA, beta=BETA,
                    permute_len=PERMUTE_LEN):
    """Pure-JAX reimplementation of the PyTorch forward (for validation)."""
    def pdist(e, eps=EPS):
        sq = jnp.sum(e ** 2, axis=1)
        prod = e @ e.T
        res = jnp.sqrt(jnp.clip(sq[:, None] + sq[None, :] - 2.0 * prod, eps))
        n = e.shape[0]
        return res * (1.0 - jnp.eye(n, dtype=e.dtype))

    score_t = -alpha * pdist(teacher) ** beta
    score_s = -alpha * pdist(student) ** beta
    idx = jnp.argsort(-score_t, axis=1)[:, 1:permute_len + 1]
    ordered = jnp.take_along_axis(score_s, idx, axis=1)
    lses = jnp.stack(
        [jax.scipy.special.logsumexp(ordered[:, i:], axis=1)
         for i in range(permute_len)], axis=1)
    log_prob = jnp.sum(ordered - lses, axis=1)
    return jnp.mean(-log_prob)


if __name__ == "__main__":
    key = jax.random.PRNGKey(0)
    k1, k2 = jax.random.split(key)
    N, D = 8, 32                      # N samples, D-dim embeddings
    student = jax.random.normal(k1, (N, D), dtype=jnp.float32)
    teacher = jax.random.normal(k2, (N, D), dtype=jnp.float32)

    loss = hard_darkrank_loss(student, teacher)
    jax.block_until_ready(loss)

    ref = _reference_loss(student, teacher)
    np.testing.assert_allclose(np.asarray(loss), np.asarray(ref),
                               rtol=1e-4, atol=1e-5)
    print("KERNEL_OK")
</pallas_src>

<mosaic_0001>
module attributes {stable_mosaic.version = 11 : i64} {
  func.func @_hard_darkrank_kernel(%arg0: i32, %arg1: memref<8x32xf32, #tpu.memory_space<vmem>>, %arg2: memref<8x32xf32, #tpu.memory_space<vmem>>, %arg3: memref<32x8xf32, #tpu.memory_space<vmem>>, %arg4: memref<32x8xf32, #tpu.memory_space<vmem>>, %arg5: memref<1x8xf32, #tpu.memory_space<vmem>>, %arg6: memref<1x8xf32, #tpu.memory_space<vmem>>, %arg7: memref<8x1xf32, #tpu.memory_space<vmem>>, %arg8: memref<8x1xf32, #tpu.memory_space<vmem>>, %arg9: memref<1x1xf32, #tpu.memory_space<smem>>) attributes {dimension_semantics = [#tpu.dimension_semantics<parallel>], iteration_bounds = array<i64: 1>, scalar_prefetch = 0 : i64, scratch_operands = 0 : i64, tpu.core_type = #tpu.core_type<tc>, window_params = [{transform_indices = @transform_0, window_bounds = array<i64: 8, 32>}, {transform_indices = @transform_1, window_bounds = array<i64: 8, 32>}, {pipeline_mode = #tpu.pipeline_mode<synchronous>, transform_indices = @transform_2, window_bounds = array<i64: 32, 8>}, {pipeline_mode = #tpu.pipeline_mode<synchronous>, transform_indices = @transform_3, window_bounds = array<i64: 32, 8>}, {pipeline_mode = #tpu.pipeline_mode<synchronous>, transform_indices = @transform_4, window_bounds = array<i64: 1, 8>}, {pipeline_mode = #tpu.pipeline_mode<synchronous>, transform_indices = @transform_5, window_bounds = array<i64: 1, 8>}, {transform_indices = @transform_6, window_bounds = array<i64: 8, 1>}, {transform_indices = @transform_7, window_bounds = array<i64: 8, 1>}, {transform_indices = @transform_8, window_bounds = array<i64: 1, 1>}]} {
    %c8_i32 = arith.constant 8 : i32
    %0 = arith.muli %arg0, %c8_i32 : i32
    %c0 = arith.constant 0 : index
    %c0_0 = arith.constant 0 : index
    %1 = vector.load %arg2[%c0, %c0_0] : memref<8x32xf32, #tpu.memory_space<vmem>>, vector<8x32xf32>
    %c0_1 = arith.constant 0 : index
    %c0_2 = arith.constant 0 : index
    %2 = vector.load %arg4[%c0_1, %c0_2] : memref<32x8xf32, #tpu.memory_space<vmem>>, vector<32x8xf32>
    %cst = arith.constant dense<0.000000e+00> : vector<8x8xf32>
    %3 = tpu.matmul %1, %2, %cst {dimension_numbers = #tpu.dot_dimension_numbers<[1], [0], [0], [1], [0, 0, 1, 1], [], []>} : vector<8x32xf32>, vector<32x8xf32>, vector<8x8xf32> -> vector<8x8xf32>
    %c0_3 = arith.constant 0 : index
    %c0_4 = arith.constant 0 : index
    %4 = vector.load %arg1[%c0_3, %c0_4] : memref<8x32xf32, #tpu.memory_space<vmem>>, vector<8x32xf32>
    %c0_5 = arith.constant 0 : index
    %c0_6 = arith.constant 0 : index
    %5 = vector.load %arg3[%c0_5, %c0_6] : memref<32x8xf32, #tpu.memory_space<vmem>>, vector<32x8xf32>
    %cst_7 = arith.constant dense<0.000000e+00> : vector<8x8xf32>
    %6 = tpu.matmul %4, %5, %cst_7 {dimension_numbers = #tpu.dot_dimension_numbers<[1], [0], [0], [1], [0, 0, 1, 1], [], []>} : vector<8x32xf32>, vector<32x8xf32>, vector<8x8xf32> -> vector<8x8xf32>
    %c0_8 = arith.constant 0 : index
    %c0_9 = arith.constant 0 : index
    %7 = vector.load %arg8[%c0_8, %c0_9] : memref<8x1xf32, #tpu.memory_space<vmem>>, vector<8x1xf32>
    %c0_10 = arith.constant 0 : index
    %c0_11 = arith.constant 0 : index
    %8 = vector.load %arg6[%c0_10, %c0_11] : memref<1x8xf32, #tpu.memory_space<vmem>>, vector<1x8xf32>
    %9 = vector.broadcast %7 : vector<8x1xf32> to vector<8x8xf32>
    %10 = vector.broadcast %8 : vector<1x8xf32> to vector<8x8xf32>
    %11 = arith.addf %9, %10 : vector<8x8xf32>
    %cst_12 = arith.constant 2.000000e+00 : f32
    %12 = vector.broadcast %cst_12 : f32 to vector<8x8xf32>
    %13 = arith.mulf %12, %3 : vector<8x8xf32>
    %14 = arith.subf %11, %13 : vector<8x8xf32>
    %cst_13 = arith.constant 9.99999996E-13 : f32
    %15 = vector.broadcast %cst_13 : f32 to vector<8x8xf32>
    %16 = arith.maximumf %14, %15 : vector<8x8xf32>
    %c0_14 = arith.constant 0 : index
    %c0_15 = arith.constant 0 : index
    %17 = vector.load %arg7[%c0_14, %c0_15] : memref<8x1xf32, #tpu.memory_space<vmem>>, vector<8x1xf32>
    %c0_16 = arith.constant 0 : index
    %c0_17 = arith.constant 0 : index
    %18 = vector.load %arg5[%c0_16, %c0_17] : memref<1x8xf32, #tpu.memory_space<vmem>>, vector<1x8xf32>
    %19 = vector.broadcast %17 : vector<8x1xf32> to vector<8x8xf32>
    %20 = vector.broadcast %18 : vector<1x8xf32> to vector<8x8xf32>
    %21 = arith.addf %19, %20 : vector<8x8xf32>
    %cst_18 = arith.constant 2.000000e+00 : f32
    %22 = vector.broadcast %cst_18 : f32 to vector<8x8xf32>
    %23 = arith.mulf %22, %6 : vector<8x8xf32>
    %24 = arith.subf %21, %23 : vector<8x8xf32>
    %cst_19 = arith.constant 9.99999996E-13 : f32
    %25 = vector.broadcast %cst_19 : f32 to vector<8x8xf32>
    %26 = arith.maximumf %24, %25 : vector<8x8xf32>
    %27 = tpu.iota {dimensions = array<i32: 1>} : vector<8x8xi32>
    %28 = tpu.iota {dimensions = array<i32: 0>} : vector<8x8xi32>
    %29 = vector.broadcast %0 : i32 to vector<8x8xi32>
    %30 = arith.subi %27, %29 : vector<8x8xi32>
    %31 = arith.cmpi eq, %30, %28 : vector<8x8xi32>
    %cst_20 = arith.constant 0x7F800000 : f32
    %32 = vector.broadcast %cst_20 : f32 to vector<8x8xf32>
    %33 = arith.select %31, %32, %16 : vector<8x8xi1>, vector<8x8xf32>
    %cst_21 = arith.constant dense<0x7F800000> : vector<8xf32>
    %34 = vector.multi_reduction <minimumf>, %33, %cst_21 [1] : vector<8x8xf32> to vector<8xf32>
    %35 = vector.shape_cast %34 : vector<8xf32> to vector<8x1xf32>
    %36 = vector.broadcast %35 : vector<8x1xf32> to vector<8x8xf32>
    %37 = arith.cmpf oeq, %33, %36 : vector<8x8xf32>
    %c8_i32_22 = arith.constant 8 : i32
    %38 = vector.broadcast %c8_i32_22 : i32 to vector<8x8xi32>
    %39 = arith.select %37, %27, %38 : vector<8x8xi1>, vector<8x8xi32>
    %cst_23 = arith.constant dense<2147483647> : vector<8xi32>
    %40 = vector.multi_reduction <minsi>, %39, %cst_23 [1] : vector<8x8xi32> to vector<8xi32>
    %41 = vector.shape_cast %40 : vector<8xi32> to vector<8x1xi32>
    %42 = vector.broadcast %41 : vector<8x1xi32> to vector<8x8xi32>
    %43 = arith.cmpi eq, %27, %42 : vector<8x8xi32>
    %cst_24 = arith.constant 0.000000e+00 : f32
    %44 = vector.broadcast %cst_24 : f32 to vector<8x8xf32>
    %45 = arith.select %43, %26, %44 : vector<8x8xi1>, vector<8x8xf32>
    %cst_25 = arith.constant dense<0.000000e+00> : vector<8xf32>
    %46 = vector.multi_reduction <add>, %45, %cst_25 [1] : vector<8x8xf32> to vector<8xf32>
    %47 = vector.shape_cast %46 : vector<8xf32> to vector<8x1xf32>
    %cst_26 = arith.constant 0x7F800000 : f32
    %48 = vector.broadcast %cst_26 : f32 to vector<8x8xf32>
    %49 = arith.select %43, %48, %33 : vector<8x8xi1>, vector<8x8xf32>
    %cst_27 = arith.constant dense<0x7F800000> : vector<8xf32>
    %50 = vector.multi_reduction <minimumf>, %49, %cst_27 [1] : vector<8x8xf32> to vector<8xf32>
    %51 = vector.shape_cast %50 : vector<8xf32> to vector<8x1xf32>
    %52 = vector.broadcast %51 : vector<8x1xf32> to vector<8x8xf32>
    %53 = arith.cmpf oeq, %49, %52 : vector<8x8xf32>
    %c8_i32_28 = arith.constant 8 : i32
    %54 = vector.broadcast %c8_i32_28 : i32 to vector<8x8xi32>
    %55 = arith.select %53, %27, %54 : vector<8x8xi1>, vector<8x8xi32>
    %cst_29 = arith.constant dense<2147483647> : vector<8xi32>
    %56 = vector.multi_reduction <minsi>, %55, %cst_29 [1] : vector<8x8xi32> to vector<8xi32>
    %57 = vector.shape_cast %56 : vector<8xi32> to vector<8x1xi32>
    %58 = vector.broadcast %57 : vector<8x1xi32> to vector<8x8xi32>
    %59 = arith.cmpi eq, %27, %58 : vector<8x8xi32>
    %cst_30 = arith.constant 0.000000e+00 : f32
    %60 = vector.broadcast %cst_30 : f32 to vector<8x8xf32>
    %61 = arith.select %59, %26, %60 : vector<8x8xi1>, vector<8x8xf32>
    %cst_31 = arith.constant dense<0.000000e+00> : vector<8xf32>
    %62 = vector.multi_reduction <add>, %61, %cst_31 [1] : vector<8x8xf32> to vector<8xf32>
    %63 = vector.shape_cast %62 : vector<8xf32> to vector<8x1xf32>
    %cst_32 = arith.constant 0x7F800000 : f32
    %64 = vector.broadcast %cst_32 : f32 to vector<8x8xf32>
    %65 = arith.select %59, %64, %49 : vector<8x8xi1>, vector<8x8xf32>
    %cst_33 = arith.constant dense<0x7F800000> : vector<8xf32>
    %66 = vector.multi_reduction <minimumf>, %65, %cst_33 [1] : vector<8x8xf32> to vector<8xf32>
    %67 = vector.shape_cast %66 : vector<8xf32> to vector<8x1xf32>
    %68 = vector.broadcast %67 : vector<8x1xf32> to vector<8x8xf32>
    %69 = arith.cmpf oeq, %65, %68 : vector<8x8xf32>
    %c8_i32_34 = arith.constant 8 : i32
    %70 = vector.broadcast %c8_i32_34 : i32 to vector<8x8xi32>
    %71 = arith.select %69, %27, %70 : vector<8x8xi1>, vector<8x8xi32>
    %cst_35 = arith.constant dense<2147483647> : vector<8xi32>
    %72 = vector.multi_reduction <minsi>, %71, %cst_35 [1] : vector<8x8xi32> to vector<8xi32>
    %73 = vector.shape_cast %72 : vector<8xi32> to vector<8x1xi32>
    %74 = vector.broadcast %73 : vector<8x1xi32> to vector<8x8xi32>
    %75 = arith.cmpi eq, %27, %74 : vector<8x8xi32>
    %cst_36 = arith.constant 0.000000e+00 : f32
    %76 = vector.broadcast %cst_36 : f32 to vector<8x8xf32>
    %77 = arith.select %75, %26, %76 : vector<8x8xi1>, vector<8x8xf32>
    %cst_37 = arith.constant dense<0.000000e+00> : vector<8xf32>
    %78 = vector.multi_reduction <add>, %77, %cst_37 [1] : vector<8x8xf32> to vector<8xf32>
    %79 = vector.shape_cast %78 : vector<8xf32> to vector<8x1xf32>
    %cst_38 = arith.constant 0x7F800000 : f32
    %80 = vector.broadcast %cst_38 : f32 to vector<8x8xf32>
    %81 = arith.select %75, %80, %65 : vector<8x8xi1>, vector<8x8xf32>
    %cst_39 = arith.constant dense<0x7F800000> : vector<8xf32>
    %82 = vector.multi_reduction <minimumf>, %81, %cst_39 [1] : vector<8x8xf32> to vector<8xf32>
    %83 = vector.shape_cast %82 : vector<8xf32> to vector<8x1xf32>
    %84 = vector.broadcast %83 : vector<8x1xf32> to vector<8x8xf32>
    %85 = arith.cmpf oeq, %81, %84 : vector<8x8xf32>
    %c8_i32_40 = arith.constant 8 : i32
    %86 = vector.broadcast %c8_i32_40 : i32 to vector<8x8xi32>
    %87 = arith.select %85, %27, %86 : vector<8x8xi1>, vector<8x8xi32>
    %cst_41 = arith.constant dense<2147483647> : vector<8xi32>
    %88 = vector.multi_reduction <minsi>, %87, %cst_41 [1] : vector<8x8xi32> to vector<8xi32>
    %89 = vector.shape_cast %88 : vector<8xi32> to vector<8x1xi32>
    %90 = vector.broadcast %89 : vector<8x1xi32> to vector<8x8xi32>
    %91 = arith.cmpi eq, %27, %90 : vector<8x8xi32>
    %cst_42 = arith.constant 0.000000e+00 : f32
    %92 = vector.broadcast %cst_42 : f32 to vector<8x8xf32>
    %93 = arith.select %91, %26, %92 : vector<8x8xi1>, vector<8x8xf32>
    %cst_43 = arith.constant dense<0.000000e+00> : vector<8xf32>
    %94 = vector.multi_reduction <add>, %93, %cst_43 [1] : vector<8x8xf32> to vector<8xf32>
    %95 = vector.shape_cast %94 : vector<8xf32> to vector<8x1xf32>
    %96 = math.sqrt %47 : vector<8x1xf32>
    %97 = arith.mulf %47, %96 : vector<8x1xf32>
    %cst_44 = arith.constant -3.000000e+00 : f32
    %98 = vector.broadcast %cst_44 : f32 to vector<8x1xf32>
    %99 = arith.mulf %98, %97 : vector<8x1xf32>
    %100 = math.sqrt %63 : vector<8x1xf32>
    %101 = arith.mulf %63, %100 : vector<8x1xf32>
    %cst_45 = arith.constant -3.000000e+00 : f32
    %102 = vector.broadcast %cst_45 : f32 to vector<8x1xf32>
    %103 = arith.mulf %102, %101 : vector<8x1xf32>
    %104 = math.sqrt %79 : vector<8x1xf32>
    %105 = arith.mulf %79, %104 : vector<8x1xf32>
    %cst_46 = arith.constant -3.000000e+00 : f32
    %106 = vector.broadcast %cst_46 : f32 to vector<8x1xf32>
    %107 = arith.mulf %106, %105 : vector<8x1xf32>
    %108 = math.sqrt %95 : vector<8x1xf32>
    %109 = arith.mulf %95, %108 : vector<8x1xf32>
    %cst_47 = arith.constant -3.000000e+00 : f32
    %110 = vector.broadcast %cst_47 : f32 to vector<8x1xf32>
    %111 = arith.mulf %110, %109 : vector<8x1xf32>
    %cst_48 = arith.constant 0.000000e+00 : f32
    %112 = vector.broadcast %cst_48 : f32 to vector<8x1xf32>
    %113 = arith.maximumf %107, %111 : vector<8x1xf32>
    %114 = arith.subf %107, %113 : vector<8x1xf32>
    %115 = math.exp %114 : vector<8x1xf32>
    %116 = arith.subf %111, %113 : vector<8x1xf32>
    %117 = math.exp %116 : vector<8x1xf32>
    %118 = arith.addf %115, %117 : vector<8x1xf32>
    %119 = math.log %118 : vector<8x1xf32>
    %120 = arith.addf %113, %119 : vector<8x1xf32>
    %121 = arith.subf %107, %120 : vector<8x1xf32>
    %122 = arith.addf %112, %121 : vector<8x1xf32>
    %123 = arith.maximumf %103, %120 : vector<8x1xf32>
    %124 = arith.subf %103, %123 : vector<8x1xf32>
    %125 = math.exp %124 : vector<8x1xf32>
    %126 = arith.subf %120, %123 : vector<8x1xf32>
    %127 = math.exp %126 : vector<8x1xf32>
    %128 = arith.addf %125, %127 : vector<8x1xf32>
    %129 = math.log %128 : vector<8x1xf32>
    %130 = arith.addf %123, %129 : vector<8x1xf32>
    %131 = arith.subf %103, %130 : vector<8x1xf32>
    %132 = arith.addf %122, %131 : vector<8x1xf32>
    %133 = arith.maximumf %99, %130 : vector<8x1xf32>
    %134 = arith.subf %99, %133 : vector<8x1xf32>
    %135 = math.exp %134 : vector<8x1xf32>
    %136 = arith.subf %130, %133 : vector<8x1xf32>
    %137 = math.exp %136 : vector<8x1xf32>
    %138 = arith.addf %135, %137 : vector<8x1xf32>
    %139 = math.log %138 : vector<8x1xf32>
    %140 = arith.addf %133, %139 : vector<8x1xf32>
    %141 = arith.subf %99, %140 : vector<8x1xf32>
    %142 = arith.addf %132, %141 : vector<8x1xf32>
    %cst_49 = arith.constant 0.000000e+00 : f32
    %143 = vector.broadcast %cst_49 : f32 to vector<8x1xf32>
    %144 = arith.subf %143, %142 : vector<8x1xf32>
    %145 = vector.shape_cast %144 : vector<8x1xf32> to vector<1x8x1xf32>
    %cst_50 = arith.constant dense<0.000000e+00> : vector<1xf32>
    %146 = vector.multi_reduction <add>, %145, %cst_50 [1, 2] : vector<1x8x1xf32> to vector<1xf32>
    %147 = vector.shape_cast %146 : vector<1xf32> to vector<1x1x1xf32>
    %148 = vector.extract %147[0, 0, 0] : f32 from vector<1x1x1xf32>
    %c0_51 = arith.constant 0 : index
    %c0_52 = arith.constant 0 : index
    %149 = memref.load %arg9[%c0_51, %c0_52] : memref<1x1xf32, #tpu.memory_space<smem>>
    memref.store %148, %arg9[%c0_51, %c0_52] : memref<1x1xf32, #tpu.memory_space<smem>>
    return
  }
  func.func @transform_0(%arg0: i32) -> (i32, i32) {
    %c0_i32 = arith.constant 0 : i32
    %c0_i32_0 = arith.constant 0 : i32
    return %arg0, %c0_i32 : i32, i32
  }
  func.func @transform_1(%arg0: i32) -> (i32, i32) {
    %c0_i32 = arith.constant 0 : i32
    %c0_i32_0 = arith.constant 0 : i32
    return %arg0, %c0_i32 : i32, i32
  }
  func.func @transform_2(%arg0: i32) -> (i32, i32) {
    %c0_i32 = arith.constant 0 : i32
    %c0_i32_0 = arith.constant 0 : i32
    %c0_i32_1 = arith.constant 0 : i32
    return %c0_i32, %c0_i32_0 : i32, i32
  }
  func.func @transform_3(%arg0: i32) -> (i32, i32) {
    %c0_i32 = arith.constant 0 : i32
    %c0_i32_0 = arith.constant 0 : i32
    %c0_i32_1 = arith.constant 0 : i32
    return %c0_i32, %c0_i32_0 : i32, i32
  }
  func.func @transform_4(%arg0: i32) -> (i32, i32) {
    %c0_i32 = arith.constant 0 : i32
    %c0_i32_0 = arith.constant 0 : i32
    %c0_i32_1 = arith.constant 0 : i32
    return %c0_i32, %c0_i32_0 : i32, i32
  }
  func.func @transform_5(%arg0: i32) -> (i32, i32) {
    %c0_i32 = arith.constant 0 : i32
    %c0_i32_0 = arith.constant 0 : i32
    %c0_i32_1 = arith.constant 0 : i32
    return %c0_i32, %c0_i32_0 : i32, i32
  }
  func.func @transform_6(%arg0: i32) -> (i32, i32) {
    %c0_i32 = arith.constant 0 : i32
    %c0_i32_0 = arith.constant 0 : i32
    return %arg0, %c0_i32 : i32, i32
  }
  func.func @transform_7(%arg0: i32) -> (i32, i32) {
    %c0_i32 = arith.constant 0 : i32
    %c0_i32_0 = arith.constant 0 : i32
    return %arg0, %c0_i32 : i32, i32
  }
  func.func @transform_8(%arg0: i32) -> (i32, i32) {
    %c0_i32 = arith.constant 0 : i32
    %c0_i32_0 = arith.constant 0 : i32
    return %arg0, %c0_i32 : i32, i32
  }
}

</mosaic_0001>

<llo_original>
// kernel: tpu_custom_call.1
$region0: #{tpu_custom_call.1}
  #allocation0 [shape = 'u32[]', space=smem, size = 0x4, offset = 0x4, fixed_abs, tag = 'smem constant byte address 0x4 - core index']
  #allocation1 [shape = 'u32[144,128]{1,0:T(1,128)}', space=vmem, size = 0x12000, scoped, tag = 'internal scratch']
  %s0 = inlined_call_operand.vmem [shape: f32[8,32], index: 0, kind: input, shape index: {}]
  %s1 = inlined_call_operand.vmem [shape: f32[8,32], index: 1, kind: input, shape index: {}]
  %s2 = inlined_call_operand.vmem [shape: f32[32,8], index: 2, kind: input, shape index: {}]
  %s3 = inlined_call_operand.vmem [shape: f32[32,8], index: 3, kind: input, shape index: {}]
  %s4 = inlined_call_operand.vmem [shape: f32[1,8], index: 4, kind: input, shape index: {}]
  %s5 = inlined_call_operand.vmem [shape: f32[1,8], index: 5, kind: input, shape index: {}]
  %s6 = inlined_call_operand.vmem [shape: f32[8,1], index: 6, kind: input, shape index: {}]
  %s7 = inlined_call_operand.vmem [shape: f32[8,1], index: 7, kind: input, shape index: {}]
  %s8 = inlined_call_operand.hbm [shape: f32[1,1], index: 8, kind: output, shape index: {}]
  %s9 = sld [smem:[#allocation0]]
  $region42: #{tpu_custom_call.1} parent=0
    _
  %s11 = ssub.s32 1, %s9
  %s12 = scalar_select 0, %s11, %s9
  $region1: #{tpu_custom_call.1} parent=0
    #allocation2 [shape = 'u8[512]{0}', space=smem, size = 0x200, scoped, tag = 'output window, operand 0, single buffered']
    #allocation3 [shape = 's32[1]{0}', space=sflag, size = 0x4, scoped, tag = 'scoped memory for tpu_custom_call.1']
    %13 = vsyncpa [#allocation3], 0
    // Predicated region
    $region2: #{tpu_custom_call.1} parent=1 // pred_check
      _
    $region3: #{tpu_custom_call.1} parent=1 // pred_check_branch
      %15 = sbr.rel (0) target = $region5
    $region4: #{tpu_custom_call.1} parent=1 // pred_region
      _
    $region5: #{tpu_custom_call.1} parent=1 // pred_fallthru
      _
    // Predicated region
    $region6: #{tpu_custom_call.1} parent=1 // pred_check
      _
    $region7: #{tpu_custom_call.1} parent=1 // pred_check_branch
      %17 = sbr.rel (0) target = $region9
    $region8: #{tpu_custom_call.1} parent=1 // pred_region
      _
    $region9: #{tpu_custom_call.1} parent=1 // pred_fallthru
      _
    // Predicated region
    $region10: #{tpu_custom_call.1} parent=1 // pred_check
      _
    $region11: #{tpu_custom_call.1} parent=1 // pred_check_branch
      %19 = sbr.rel (0) target = $region13
    $region12: #{tpu_custom_call.1} parent=1 // pred_region
      _
    $region13: #{tpu_custom_call.1} parent=1 // pred_fallthru
      _
    // Predicated region
    $region14: #{tpu_custom_call.1} parent=1 // pred_check
      _
    $region15: #{tpu_custom_call.1} parent=1 // pred_check_branch
      %21 = sbr.rel (0) target = $region17
    $region16: #{tpu_custom_call.1} parent=1 // pred_region
      _
    $region17: #{tpu_custom_call.1} parent=1 // pred_fallthru
      _
    // Predicated region
    $region18: #{tpu_custom_call.1} parent=1 // pred_check
      _
    $region19: #{tpu_custom_call.1} parent=1 // pred_check_branch
      %23 = sbr.rel (0) target = $region21
    $region20: #{tpu_custom_call.1} parent=1 // pred_region
      _
    $region21: #{tpu_custom_call.1} parent=1 // pred_fallthru
      _
    // Predicated region
    $region22: #{tpu_custom_call.1} parent=1 // pred_check
      _
    $region23: #{tpu_custom_call.1} parent=1 // pred_check_branch
      %25 = sbr.rel (0) target = $region25
    $region24: #{tpu_custom_call.1} parent=1 // pred_region
      _
    $region25: #{tpu_custom_call.1} parent=1 // pred_fallthru
      _
    // Predicated region
    $region26: #{tpu_custom_call.1} parent=1 // pred_check
      _
    $region27: #{tpu_custom_call.1} parent=1 // pred_check_branch
      %27 = sbr.rel (0) target = $region29
    $region28: #{tpu_custom_call.1} parent=1 // pred_region
      _
    $region29: #{tpu_custom_call.1} parent=1 // pred_fallthru
      _
    // Predicated region
    $region30: #{tpu_custom_call.1} parent=1 // pred_check
      _
    $region31: #{tpu_custom_call.1} parent=1 // pred_check_branch
      %29 = sbr.rel (0) target = $region33
    $region32: #{tpu_custom_call.1} parent=1 // pred_region
      _
    $region33: #{tpu_custom_call.1} parent=1 // pred_fallthru
      _
    %s30 = smul.u32 0, 8
    %v31 = vld [vmem:[%s1] sm:$0xff]
    %v32 = vld [vmem:[%s3] sm:$0xff]
    %v33 = vld [vmem:[%s3 + $0x8] sm:$0xff]
    %v34 = vld [vmem:[%s3 + $0x10] sm:$0xff]
    %v35 = vld [vmem:[%s3 + $0x18] sm:$0xff]
    %vm36 = vcmask 261120
    %v38 = vsel %vm36, %v31, 0
    %40 = vmatprep.subr.mxu0 0.0
    %41 = vmatpush1.msra.mxu0 %v32
    %42 = vmatprep.subr.mxu0 0.0
    %43 = vmatpush1.msra.mxu0 %v33
    %44 = vmatprep.subr.mxu0 0.0
    %45 = vmatpush1.msra.mxu0 %v34
    %46 = vmatprep.subr.mxu0 0.0
    %47 = vmatpush1.msra.mxu0 %v35
    %48 = vmatprep.subr.mxu0 0.0
    %49 = vmatpush1.msra.mxu0 0.0
    %50 = vmatprep.subr.mxu0 0.0
    %51 = vmatpush1.msra.mxu0 0.0
    %52 = vmatprep.subr.mxu0 0.0
    %53 = vmatpush1.msra.mxu0 0.0
    %54 = vmatprep.subr.mxu0 0.0
    %55 = vmatpush1.msra.mxu0 0.0
    %56 = vmatprep.subr.mxu0 0.0
    %57 = vmatpush1.msra.mxu0 0.0
    %58 = vmatprep.subr.mxu0 0.0
    %59 = vmatpush1.msra.mxu0 0.0
    %60 = vmatprep.subr.mxu0 0.0
    %61 = vmatpush1.msra.mxu0 0.0
    %62 = vmatprep.subr.mxu0 0.0
    %63 = vmatpush1.msra.mxu0 0.0
    %64 = vmatprep.subr.mxu0 0.0
    %65 = vmatpush1.msra.mxu0 0.0
    %66 = vmatprep.subr.mxu0 0.0
    %67 = vmatpush1.msra.mxu0 0.0
    %68 = vmatprep.subr.mxu0 0.0
    %69 = vmatpush1.msra.mxu0 0.0
    %70 = vmatprep.subr.mxu0 0.0
    %71 = vmatpush1.msra.mxu0 0.0
    %72 = vmatprep.subr.mxu0 0.0
    %73 = vmatpush1.msra.mxu0 0.0
    %74 = vmatprep.subr.mxu0 0.0
    %75 = vmatpush1.msra.mxu0 0.0
    %76 = vmatprep.subr.mxu0 0.0
    %77 = vmatpush1.msra.mxu0 0.0
    %78 = vmatprep.subr.mxu0 0.0
    %79 = vmatpush1.msra.mxu0 0.0
    %80 = vmatprep.subr.mxu0 0.0
    %81 = vmatpush1.msra.mxu0 0.0
    %82 = vmatprep.subr.mxu0 0.0
    %83 = vmatpush1.msra.mxu0 0.0
    %84 = vmatprep.subr.mxu0 0.0
    %85 = vmatpush1.msra.mxu0 0.0
    %86 = vmatprep.subr.mxu0 0.0
    %87 = vmatpush1.msra.mxu0 0.0
    %88 = vmatprep.subr.mxu0 0.0
    %89 = vmatpush1.msra.mxu0 0.0
    %90 = vmatprep.subr.mxu0 0.0
    %91 = vmatpush1.msra.mxu0 0.0
    %92 = vmatprep.subr.mxu0 0.0
    %93 = vmatpush1.msra.mxu0 0.0
    %94 = vmatprep.subr.mxu0 0.0
    %95 = vmatpush1.msra.mxu0 0.0
    %96 = vmatprep.subr.mxu0 0.0
    %97 = vmatpush1.msra.mxu0 0.0
    %98 = vmatprep.subr.mxu0 0.0
    %99 = vmatpush1.msra.mxu0 0.0
    %100 = vmatprep.subr.mxu0 0.0
    %101 = vmatpush1.msra.mxu0 0.0
    %102 = vmatprep.subr.mxu0 0.0
    %103 = vmatpush1.msra.mxu0 0.0
    %104 = vmatprep.mubr.f32.mxu0 0.0
    %105 = vmatmul.mubr.f32.gmra.mrb[0].mxu0 %v38
    %v106 = vpop.f32.mrb[0].mxu0
    %v107 = vadd.f32 0.0, %v106
    %v108 = vpop.f32.mrb[0].mxu0
    %109 = vdwg.mxu0
    %v110 = vld [vmem:[%s0] sm:$0xff]
    %v111 = vld [vmem:[%s2] sm:$0xff]
    %v112 = vld [vmem:[%s2 + $0x8] sm:$0xff]
    %v113 = vld [vmem:[%s2 + $0x10] sm:$0xff]
    %v114 = vld [vmem:[%s2 + $0x18] sm:$0xff]
    %v116 = vsel %vm36, %v110, 0
    %118 = vmatprep.subr.mxu0 0.0
    %119 = vmatpush1.msra.mxu0 %v111
    %120 = vmatprep.subr.mxu0 0.0
    %121 = vmatpush1.msra.mxu0 %v112
    %122 = vmatprep.subr.mxu0 0.0
    %123 = vmatpush1.msra.mxu0 %v113
    %124 = vmatprep.subr.mxu0 0.0
    %125 = vmatpush1.msra.mxu0 %v114
    %126 = vmatprep.subr.mxu0 0.0
    %127 = vmatpush1.msra.mxu0 0.0
    %128 = vmatprep.subr.mxu0 0.0
    %129 = vmatpush1.msra.mxu0 0.0
    %130 = vmatprep.subr.mxu0 0.0
    %131 = vmatpush1.msra.mxu0 0.0
    %132 = vmatprep.subr.mxu0 0.0
    %133 = vmatpush1.msra.mxu0 0.0
    %134 = vmatprep.subr.mxu0 0.0
    %135 = vmatpush1.msra.mxu0 0.0
    %136 = vmatprep.subr.mxu0 0.0
    %137 = vmatpush1.msra.mxu0 0.0
    %138 = vmatprep.subr.mxu0 0.0
    %139 = vmatpush1.msra.mxu0 0.0
    %140 = vmatprep.subr.mxu0 0.0
    %141 = vmatpush1.msra.mxu0 0.0
    %142 = vmatprep.subr.mxu0 0.0
    %143 = vmatpush1.msra.mxu0 0.0
    %144 = vmatprep.subr.mxu0 0.0
    %145 = vmatpush1.msra.mxu0 0.0
    %146 = vmatprep.subr.mxu0 0.0
    %147 = vmatpush1.msra.mxu0 0.0
    %148 = vmatprep.subr.mxu0 0.0
    %149 = vmatpush1.msra.mxu0 0.0
    %150 = vmatprep.subr.mxu0 0.0
    %151 = vmatpush1.msra.mxu0 0.0
    %152 = vmatprep.subr.mxu0 0.0
    %153 = vmatpush1.msra.mxu0 0.0
    %154 = vmatprep.subr.mxu0 0.0
    %155 = vmatpush1.msra.mxu0 0.0
    %156 = vmatprep.subr.mxu0 0.0
    %157 = vmatpush1.msra.mxu0 0.0
    %158 = vmatprep.subr.mxu0 0.0
    %159 = vmatpush1.msra.mxu0 0.0
    %160 = vmatprep.subr.mxu0 0.0
    %161 = vmatpush1.msra.mxu0 0.0
    %162 = vmatprep.subr.mxu0 0.0
    %163 = vmatpush1.msra.mxu0 0.0
    %164 = vmatprep.subr.mxu0 0.0
    %165 = vmatpush1.msra.mxu0 0.0
    %166 = vmatprep.subr.mxu0 0.0
    %167 = vmatpush1.msra.mxu0 0.0
    %168 = vmatprep.subr.mxu0 0.0
    %169 = vmatpush1.msra.mxu0 0.0
    %170 = vmatprep.subr.mxu0 0.0
    %171 = vmatpush1.msra.mxu0 0.0
    %172 = vmatprep.subr.mxu0 0.0
    %173 = vmatpush1.msra.mxu0 0.0
    %174 = vmatprep.subr.mxu0 0.0
    %175 = vmatpush1.msra.mxu0 0.0
    %176 = vmatprep.subr.mxu0 0.0
    %177 = vmatpush1.msra.mxu0 0.0
    %178 = vmatprep.subr.mxu0 0.0
    %179 = vmatpush1.msra.mxu0 0.0
    %180 = vmatprep.subr.mxu0 0.0
    %181 = vmatpush1.msra.mxu0 0.0
    %182 = vmatprep.mubr.f32.mxu0 0.0
    %183 = vmatmul.mubr.f32.gmra.mrb[0].mxu0 %v116
    %v184 = vpop.f32.mrb[0].mxu0
    %v185 = vadd.f32 0.0, %v184
    %v186 = vpop.f32.mrb[0].mxu0
    %187 = vdwg.mxu0
    %v188 = vld [vmem:[%s7] sm:$0xff]
    %v189 = vld [vmem:[%s5] sm:$0x1]
    %191 = vset.pattern.permute.xlu0 0
    %192 = vperm.xlu0 %191, %v188
    %v193 = vpop.permute.xlu0 %192
    %v196 = vlaneseq
    %v197 = vshrl.u32 %v196, 7
    %v198 = vsub.s32 0, %v197
    %v199 = vrot.slane %v189, %v198
    %v201 = vadd.f32 %v193, %v199
    %v202 = vmul.f32 %v107, 2.0
    %v203 = vsub.f32 %v201, %v202
    %v204 = vmax.f32 %v203, 1e-12
    %v205 = vld [vmem:[%s6] sm:$0xff]
    %v206 = vld [vmem:[%s4] sm:$0x1]
    %208 = vset.pattern.permute.xlu0 0
    %209 = vperm.xlu0 %208, %v205
    %v210 = vpop.permute.xlu0 %209
    %v213 = vlaneseq
    %v214 = vshrl.u32 %v213, 7
    %v215 = vsub.s32 0, %v214
    %v216 = vrot.slane %v206, %v215
    %v218 = vadd.f32 %v210, %v216
    %v219 = vmul.f32 %v185, 2.0
    %v220 = vsub.f32 %v218, %v219
    %v221 = vmax.f32 %v220, 1e-12
    %v222 = vlaneseq
    %v223 = vand.u32 %v222, 127
    %v224 = vlaneseq
    %v225 = vshrl.u32 %v224, 7
    %v226 = vstv %s30
    %v227 = vsub.s32 %v223, %v226
    %vm228 = vcmp.eq.s32.totalorder %v227, %v225
    %v229 = vsel %vm228, inf, %v204
    %vm230 = vcmask 64512
    %v231 = vsel %vm230, %v229, inf
    %232 = vmin.xlane.f32.xlu0 %v231
    %v233 = vpop.xlane.xlu0 %232
    %vm234 = vcmp.eq.f32.partialorder %v229, %v233
    %v235 = vsel %vm234, %v223, 8
    %v236 = vsel %vm230, %v235, 2147483647
    %v237 = vand.u32 %v236, 65535
    %v238 = vshra.s32 %v236, 16
    %v239 = vcvt.s32.f32 %v237
    %v240 = vcvt.s32.f32 %v238
    %241 = vmin.xlane.f32.xlu0 %v240
    %v242 = vpop.xlane.xlu0 %241
    %vm243 = vcmp.eq.f32.partialorder %v240, %v242
    %v244 = vsel %vm243, %v239, inf
    %245 = vmin.xlane.f32.xlu0 %v244
    %v246 = vpop.xlane.xlu0 %245
    %v247 = vcvt.f32.s32 %v246
    %v248 = vcvt.f32.s32 %v242
    %v249 = vshll.u32 %v248, 16
    %v250 = vadd.s32 %v249, %v247
    %vm251 = vcmp.eq.s32.totalorder %v223, %v250
    %v252 = vsel %vm251, %v221, 0.0
    %v253 = vsel %vm230, %v252, 0.0
    %254 = vadd.xlane.f32.xlu0 %v253
    %v255 = vpop.xlane.xlu0 %254
    %v256 = vsel %vm251, inf, %v229
    %v257 = vsel %vm230, %v256, inf
    %258 = vmin.xlane.f32.xlu0 %v257
    %v259 = vpop.xlane.xlu0 %258
    %vm260 = vcmp.eq.f32.partialorder %v256, %v259
    %v261 = vsel %vm260, %v223, 8
    %v262 = vsel %vm230, %v261, 2147483647
    %v263 = vand.u32 %v262, 65535
    %v264 = vshra.s32 %v262, 16
    %v265 = vcvt.s32.f32 %v263
    %v266 = vcvt.s32.f32 %v264
    %267 = vmin.xlane.f32.xlu0 %v266
    %v268 = vpop.xlane.xlu0 %267
    %vm269 = vcmp.eq.f32.partialorder %v266, %v268
    %v270 = vsel %vm269, %v265, inf
    %271 = vmin.xlane.f32.xlu0 %v270
    %v272 = vpop.xlane.xlu0 %271
    %v273 = vcvt.f32.s32 %v272
    %v274 = vcvt.f32.s32 %v268
    %v275 = vshll.u32 %v274, 16
    %v276 = vadd.s32 %v275, %v273
    %vm277 = vcmp.eq.s32.totalorder %v223, %v276
    %v278 = vsel %vm277, %v221, 0.0
    %v279 = vsel %vm230, %v278, 0.0
    %280 = vadd.xlane.f32.xlu0 %v279
    %v281 = vpop.xlane.xlu0 %280
    %v282 = vsel %vm277, inf, %v256
    %v283 = vsel %vm230, %v282, inf
    %284 = vmin.xlane.f32.xlu0 %v283
    %v285 = vpop.xlane.xlu0 %284
    %vm286 = vcmp.eq.f32.partialorder %v282, %v285
    %v287 = vsel %vm286, %v223, 8
    %v288 = vsel %vm230, %v287, 2147483647
    %v289 = vand.u32 %v288, 65535
    %v290 = vshra.s32 %v288, 16
    %v291 = vcvt.s32.f32 %v289
    %v292 = vcvt.s32.f32 %v290
    %293 = vmin.xlane.f32.xlu0 %v292
    %v294 = vpop.xlane.xlu0 %293
    %vm295 = vcmp.eq.f32.partialorder %v292, %v294
    %v296 = vsel %vm295, %v291, inf
    %297 = vmin.xlane.f32.xlu0 %v296
    %v298 = vpop.xlane.xlu0 %297
    %v299 = vcvt.f32.s32 %v298
    %v300 = vcvt.f32.s32 %v294
    %v301 = vshll.u32 %v300, 16
    %v302 = vadd.s32 %v301, %v299
    %vm303 = vcmp.eq.s32.totalorder %v223, %v302
    %v304 = vsel %vm303, %v221, 0.0
    %v305 = vsel %vm230, %v304, 0.0
    %306 = vadd.xlane.f32.xlu0 %v305
    %v307 = vpop.xlane.xlu0 %306
    %v308 = vsel %vm303, inf, %v282
    %v309 = vsel %vm230, %v308, inf
    %310 = vmin.xlane.f32.xlu0 %v309
    %v311 = vpop.xlane.xlu0 %310
    %vm312 = vcmp.eq.f32.partialorder %v308, %v311
    %v313 = vsel %vm312, %v223, 8
    %v314 = vsel %vm230, %v313, 2147483647
    %v315 = vand.u32 %v314, 65535
    %v316 = vshra.s32 %v314, 16
    %v317 = vcvt.s32.f32 %v315
    %v318 = vcvt.s32.f32 %v316
    %319 = vmin.xlane.f32.xlu0 %v318
    %v320 = vpop.xlane.xlu0 %319
    %vm321 = vcmp.eq.f32.partialorder %v318, %v320
    %v322 = vsel %vm321, %v317, inf
    %323 = vmin.xlane.f32.xlu0 %v322
    %v324 = vpop.xlane.xlu0 %323
    %v325 = vcvt.f32.s32 %v324
    %v326 = vcvt.f32.s32 %v320
    %v327 = vshll.u32 %v326, 16
    %v328 = vadd.s32 %v327, %v325
    %vm329 = vcmp.eq.s32.totalorder %v223, %v328
    %v330 = vsel %vm329, %v221, 0.0
    %v331 = vsel %vm230, %v330, 0.0
    %332 = vadd.xlane.f32.xlu0 %v331
    %v333 = vpop.xlane.xlu0 %332
    %v334 = vrsqrt.pop %v255
    %v335 = vmul.f32 %v255, %v334
    %vm336 = vcmp.eq.f32.partialorder %v255, inf
    %v337 = vsel %vm336, %v255, %v335
    %vm338 = vcmp.eq.f32.partialorder %v255, 0.0
    %v339 = vand.u32 %v255, 2147483648
    %v340 = vsel %vm338, %v339, %v337
    %v341 = vmul.f32 %v255, %v340
    %v342 = vmul.f32 %v341, -3.0
    %v343 = vrsqrt.pop %v281
    %v344 = vmul.f32 %v281, %v343
    %vm345 = vcmp.eq.f32.partialorder %v281, inf
    %v346 = vsel %vm345, %v281, %v344
    %vm347 = vcmp.eq.f32.partialorder %v281, 0.0
    %v348 = vand.u32 %v281, 2147483648
    %v349 = vsel %vm347, %v348, %v346
    %v350 = vmul.f32 %v281, %v349
    %v351 = vmul.f32 %v350, -3.0
    %v352 = vrsqrt.pop %v307
    %v353 = vmul.f32 %v307, %v352
    %vm354 = vcmp.eq.f32.partialorder %v307, inf
    %v355 = vsel %vm354, %v307, %v353
    %vm356 = vcmp.eq.f32.partialorder %v307, 0.0
    %v357 = vand.u32 %v307, 2147483648
    %v358 = vsel %vm356, %v357, %v355
    %v359 = vmul.f32 %v307, %v358
    %v360 = vmul.f32 %v359, -3.0
    %v361 = vrsqrt.pop %v333
    %v362 = vmul.f32 %v333, %v361
    %vm363 = vcmp.eq.f32.partialorder %v333, inf
    %v364 = vsel %vm363, %v333, %v362
    %vm365 = vcmp.eq.f32.partialorder %v333, 0.0
    %v366 = vand.u32 %v333, 2147483648
    %v367 = vsel %vm365, %v366, %v364
    %v368 = vmul.f32 %v333, %v367
    %v369 = vmul.f32 %v368, -3.0
    %v370 = vmax.f32 %v360, %v369
    %v371 = vsub.f32 %v360, %v370
    %v372 = vmul.f32 %v371, 1.442695
    %v373 = vpow.pop %v372
    %v374 = vsub.f32 %v369, %v370
    %v375 = vmul.f32 %v374, 1.442695
    %v376 = vpow.pop %v375
    %v377 = vadd.f32 %v373, %v376
    %v378 = vlog2.pop %v377
    %v379 = vmul.f32 %v378, 0.6931472
    %v380 = vadd.f32 %v370, %v379
    %v381 = vsub.f32 %v360, %v380
    %v382 = vadd.f32 %v381, 0.0
    %v383 = vmax.f32 %v351, %v380
    %v384 = vsub.f32 %v351, %v383
    %v385 = vmul.f32 %v384, 1.442695
    %v386 = vpow.pop %v385
    %v387 = vsub.f32 %v380, %v383
    %v388 = vmul.f32 %v387, 1.442695
    %v389 = vpow.pop %v388
    %v390 = vadd.f32 %v386, %v389
    %v391 = vlog2.pop %v390
    %v392 = vmul.f32 %v391, 0.6931472
    %v393 = vadd.f32 %v383, %v392
    %v394 = vsub.f32 %v351, %v393
    %v395 = vadd.f32 %v382, %v394
    %v396 = vmax.f32 %v342, %v393
    %v397 = vsub.f32 %v342, %v396
    %v398 = vmul.f32 %v397, 1.442695
    %v399 = vpow.pop %v398
    %v400 = vsub.f32 %v393, %v396
    %v401 = vmul.f32 %v400, 1.442695
    %v402 = vpow.pop %v401
    %v403 = vadd.f32 %v399, %v402
    %v404 = vlog2.pop %v403
    %v405 = vmul.f32 %v404, 0.6931472
    %v406 = vadd.f32 %v396, %v405
    %v407 = vsub.f32 %v342, %v406
    %v408 = vadd.f32 %v395, %v407
    %v409 = vsub.f32 0.0, %v408
    %vm410 = vcmask 7168
    %v411 = vsel %vm410, %v409, 0.0
    %412 = vadd.xlane.f32.xlu0 %v411
    %v413 = vpop.xlane.xlu0 %412
    %v414 = vrot.slane %v413, 4
    %v415 = vadd.f32 %v413, %v414
    %v416 = vrot.slane %v415, 2
    %v417 = vadd.f32 %v415, %v416
    %v418 = vrot.slane %v417, 1
    %v419 = vadd.f32 %v417, %v418
    %s420 = vtos %v419
    %s421 = scalar_lea.smem [#allocation2], 0
    %422 = sst [smem:[%s421]] %s420
    // Predicated region
    $region34: #{tpu_custom_call.1} parent=1 // pred_check
      _
    $region35: #{tpu_custom_call.1} parent=1 // pred_check_branch
      %424 = sbr.rel (0) target = $region37
    $region36: #{tpu_custom_call.1} parent=1 // pred_region
      %s426 = ssub.s32 16, 16
      %427 = vsyncadd [#allocation3], %s426
      %430 = dma.smem_to_hbm [#allocation2], 16, %s8, [#allocation3]
    $region37: #{tpu_custom_call.1} parent=1 // pred_fallthru
      _
    // Predicated region
    $region38: #{tpu_custom_call.1} parent=1 // pred_check
      _
    $region39: #{tpu_custom_call.1} parent=1 // pred_check_branch
      %432 = sbr.rel (0) target = $region41
    $region40: #{tpu_custom_call.1} parent=1 // pred_region
      %433 = dma.done [#allocation3], 16
    $region41: #{tpu_custom_call.1} parent=1 // pred_fallthru
      _
    %434 = sfence
    %435 = vsyncpa [#allocation3], 1

</llo_original>
